<compile_context>
chip_gen: v6e
topology: v6e:2x2x1
jax: 0.10.0
libtpu: 0.0.40
codegen_flags: <defaults>
</compile_context>

<pallas_src>
import functools

import jax
import jax.numpy as jnp
from jax.experimental import pallas as pl
from jax.experimental.pallas import tpu as pltpu


def _mlp_kernel(x_ref, w1_ref, b1_ref, w2_ref, b2_ref, u_ref, o_ref,
                *, dropout_p: float, training: bool):
    # ---- linear1: (TB, In) @ (In, H) + (1, H)  (weights pre-transposed) ----
    h = jnp.dot(x_ref[...], w1_ref[...],
                preferred_element_type=jnp.float32) + b1_ref[...]
    # ---- ReLU ----
    h = jnp.maximum(h, 0.0)
    # ---- Dropout(p): inverted dropout, training semantics ----
    if training and dropout_p > 0.0:
        keep = u_ref[...] >= jnp.float32(dropout_p)     # P(keep) = 1 - p
        h = jnp.where(keep, h * jnp.float32(1.0 / (1.0 - dropout_p)), 0.0)
    # ---- linear2: (TB, H) @ (H, O) + (1, O) ----
    o_ref[...] = (jnp.dot(h, w2_ref[...],
                          preferred_element_type=jnp.float32)
                  + b2_ref[...]).astype(o_ref.dtype)


def toy_model_forward(x, w1, b1, w2, b2, *, key=None, dropout_p=0.1,
                      training=True):
    """x: (B, In) f32; w1: (H, In); b1: (H,); w2: (O, H); b2: (O,).
    Weights are PyTorch-layout at the API; transposed once here."""
    B, In = x.shape
    H, O = w1.shape[0], w2.shape[0]

    # One-time layout change (free at the JAX level, kills in-kernel .T).
    w1_t = jnp.asarray(w1.T, jnp.float32)          # (In, H)
    w2_t = jnp.asarray(w2.T, jnp.float32)          # (H, O)
    b1_r = jnp.asarray(b1, jnp.float32).reshape(1, H)
    b2_r = jnp.asarray(b2, jnp.float32).reshape(1, O)

    # Per-row uniform randoms for dropout (generated outside the kernel so the
    # kernel lowers on both real TPU and interpret mode).
    if training and dropout_p > 0.0:
        if key is None:
            key = jax.random.PRNGKey(0)
        u = jax.random.uniform(key, (B, H), jnp.float32)
    else:
        u = jnp.zeros((B, H), jnp.float32)         # unused (branch compiled out)

    # Batch tile: big enough to amortize per-step overhead at large B, small
    # enough to stay inside v7x's 64 MiB VMEM with double buffering.
    TB = B if B <= 512 else 512
    assert B % TB == 0, "demo wrapper assumes batch divisible by the tile"
    grid = (B // TB,)

    kernel = functools.partial(_mlp_kernel, dropout_p=dropout_p,
                               training=training)
    return pl.pallas_call(
        kernel,
        out_shape=jax.ShapeDtypeStruct((B, O), jnp.float32),
        grid=grid,
        in_specs=[
            pl.BlockSpec((TB, In), lambda i: (i, 0)),   # x   (batch-tiled)
            pl.BlockSpec((In, H), lambda i: (0, 0)),    # w1.T (resident)
            pl.BlockSpec((1, H), lambda i: (0, 0)),     # b1   (resident)
            pl.BlockSpec((H, O), lambda i: (0, 0)),     # w2.T (resident)
            pl.BlockSpec((1, O), lambda i: (0, 0)),     # b2   (resident)
            pl.BlockSpec((TB, H), lambda i: (i, 0)),    # dropout uniforms
        ],
        out_specs=pl.BlockSpec((TB, O), lambda i: (i, 0)),
        compiler_params=pltpu.CompilerParams(
            dimension_semantics=("parallel",)),
    )(x, w1_t, b1_r, w2_t, b2_r, u)


def _init_linear(key, out_features, in_features):
    """Deterministic PyTorch-style (Kaiming-uniform-ish) init."""
    kw, kb = jax.random.split(key)
    bound = 1.0 / (in_features ** 0.5)
    w = jax.random.uniform(kw, (out_features, in_features), jnp.float32,
                           -bound, bound)
    b = jax.random.uniform(kb, (out_features,), jnp.float32, -bound, bound)
    return w, b


if __name__ == "__main__":
    input_size, hidden_size, output_size = 10, 20, 5
    batch = 8

    root = jax.random.PRNGKey(0)
    k_x, k_l1, k_l2, k_drop = jax.random.split(root, 4)

    x = jax.random.normal(k_x, (batch, input_size), jnp.float32)
    w1, b1 = _init_linear(k_l1, hidden_size, input_size)
    w2, b2 = _init_linear(k_l2, output_size, hidden_size)

    # Training mode (dropout active, deterministic given the key).
    out_train = toy_model_forward(x, w1, b1, w2, b2, key=k_drop,
                                  dropout_p=0.1, training=True)
    jax.block_until_ready(out_train)
    assert out_train.shape == (batch, output_size)

    # Reference with the same dropout mask (mask is wrapper-generated, so it
    # can be reproduced exactly).  torch's RNG bitstream itself can't match.
    u_ref = jax.random.uniform(k_drop, (batch, hidden_size), jnp.float32)
    h_ref = jnp.maximum(x @ w1.T + b1, 0.0)
    h_ref = jnp.where(u_ref >= 0.1, h_ref / 0.9, 0.0)
    ref_train = h_ref @ w2.T + b2
    assert jnp.allclose(out_train, ref_train, atol=1e-5, rtol=1e-5)

    # Eval mode (dropout = identity).
    out_eval = toy_model_forward(x, w1, b1, w2, b2, training=False)
    jax.block_until_ready(out_eval)
    ref_eval = jnp.maximum(x @ w1.T + b1, 0.0) @ w2.T + b2
    assert jnp.allclose(out_eval, ref_eval, atol=1e-5, rtol=1e-5)

    print("KERNEL_OK")
</pallas_src>

<mosaic_0001>
module attributes {stable_mosaic.version = 11 : i64} {
  func.func @_mlp_kernel(%arg0: i32, %arg1: memref<8x10xf32, #tpu.memory_space<vmem>>, %arg2: memref<10x20xf32, #tpu.memory_space<vmem>>, %arg3: memref<1x20xf32, #tpu.memory_space<vmem>>, %arg4: memref<20x5xf32, #tpu.memory_space<vmem>>, %arg5: memref<1x5xf32, #tpu.memory_space<vmem>>, %arg6: memref<8x20xf32, #tpu.memory_space<vmem>>, %arg7: memref<8x5xf32, #tpu.memory_space<vmem>>) attributes {dimension_semantics = [#tpu.dimension_semantics<parallel>], iteration_bounds = array<i64: 1>, scalar_prefetch = 0 : i64, scratch_operands = 0 : i64, tpu.core_type = #tpu.core_type<tc>, window_params = [{transform_indices = @transform_0, window_bounds = array<i64: 8, 10>}, {pipeline_mode = #tpu.pipeline_mode<synchronous>, transform_indices = @transform_1, window_bounds = array<i64: 10, 20>}, {pipeline_mode = #tpu.pipeline_mode<synchronous>, transform_indices = @transform_2, window_bounds = array<i64: 1, 20>}, {pipeline_mode = #tpu.pipeline_mode<synchronous>, transform_indices = @transform_3, window_bounds = array<i64: 20, 5>}, {pipeline_mode = #tpu.pipeline_mode<synchronous>, transform_indices = @transform_4, window_bounds = array<i64: 1, 5>}, {transform_indices = @transform_5, window_bounds = array<i64: 8, 20>}, {transform_indices = @transform_6, window_bounds = array<i64: 8, 5>}]} {
    %c0 = arith.constant 0 : index
    %c0_0 = arith.constant 0 : index
    %0 = vector.load %arg1[%c0, %c0_0] : memref<8x10xf32, #tpu.memory_space<vmem>>, vector<8x10xf32>
    %c0_1 = arith.constant 0 : index
    %c0_2 = arith.constant 0 : index
    %1 = vector.load %arg2[%c0_1, %c0_2] : memref<10x20xf32, #tpu.memory_space<vmem>>, vector<10x20xf32>
    %cst = arith.constant dense<0.000000e+00> : vector<8x20xf32>
    %2 = tpu.matmul %0, %1, %cst {dimension_numbers = #tpu.dot_dimension_numbers<[1], [0], [0], [1], [0, 0, 1, 1], [], []>} : vector<8x10xf32>, vector<10x20xf32>, vector<8x20xf32> -> vector<8x20xf32>
    %c0_3 = arith.constant 0 : index
    %c0_4 = arith.constant 0 : index
    %3 = vector.load %arg3[%c0_3, %c0_4] : memref<1x20xf32, #tpu.memory_space<vmem>>, vector<1x20xf32>
    %4 = vector.broadcast %3 : vector<1x20xf32> to vector<8x20xf32>
    %5 = arith.addf %2, %4 : vector<8x20xf32>
    %cst_5 = arith.constant 0.000000e+00 : f32
    %6 = vector.broadcast %cst_5 : f32 to vector<8x20xf32>
    %7 = arith.maximumf %5, %6 : vector<8x20xf32>
    %c0_6 = arith.constant 0 : index
    %c0_7 = arith.constant 0 : index
    %8 = vector.load %arg6[%c0_6, %c0_7] : memref<8x20xf32, #tpu.memory_space<vmem>>, vector<8x20xf32>
    %cst_8 = arith.constant 1.000000e-01 : f32
    %9 = vector.broadcast %cst_8 : f32 to vector<8x20xf32>
    %10 = arith.cmpf oge, %8, %9 : vector<8x20xf32>
    %cst_9 = arith.constant 1.11111116 : f32
    %11 = vector.broadcast %cst_9 : f32 to vector<8x20xf32>
    %12 = arith.mulf %7, %11 : vector<8x20xf32>
    %cst_10 = arith.constant 0.000000e+00 : f32
    %13 = vector.broadcast %cst_10 : f32 to vector<8x20xf32>
    %14 = arith.select %10, %12, %13 : vector<8x20xi1>, vector<8x20xf32>
    %c0_11 = arith.constant 0 : index
    %c0_12 = arith.constant 0 : index
    %15 = vector.load %arg4[%c0_11, %c0_12] : memref<20x5xf32, #tpu.memory_space<vmem>>, vector<20x5xf32>
    %cst_13 = arith.constant dense<0.000000e+00> : vector<8x5xf32>
    %16 = tpu.matmul %14, %15, %cst_13 {dimension_numbers = #tpu.dot_dimension_numbers<[1], [0], [0], [1], [0, 0, 1, 1], [], []>} : vector<8x20xf32>, vector<20x5xf32>, vector<8x5xf32> -> vector<8x5xf32>
    %c0_14 = arith.constant 0 : index
    %c0_15 = arith.constant 0 : index
    %17 = vector.load %arg5[%c0_14, %c0_15] : memref<1x5xf32, #tpu.memory_space<vmem>>, vector<1x5xf32>
    %18 = vector.broadcast %17 : vector<1x5xf32> to vector<8x5xf32>
    %19 = arith.addf %16, %18 : vector<8x5xf32>
    %c0_16 = arith.constant 0 : index
    %c0_17 = arith.constant 0 : index
    %20 = vector.load %arg7[%c0_16, %c0_17] : memref<8x5xf32, #tpu.memory_space<vmem>>, vector<8x5xf32>
    tpu.vector_store %arg7[%c0_16, %c0_17], %19 {strides = array<i32>} : memref<8x5xf32, #tpu.memory_space<vmem>>, vector<8x5xf32>,
    return
  }
  func.func @transform_0(%arg0: i32) -> (i32, i32) {
    %c0_i32 = arith.constant 0 : i32
    %c0_i32_0 = arith.constant 0 : i32
    return %arg0, %c0_i32 : i32, i32
  }
  func.func @transform_1(%arg0: i32) -> (i32, i32) {
    %c0_i32 = arith.constant 0 : i32
    %c0_i32_0 = arith.constant 0 : i32
    %c0_i32_1 = arith.constant 0 : i32
    return %c0_i32, %c0_i32_0 : i32, i32
  }
  func.func @transform_2(%arg0: i32) -> (i32, i32) {
    %c0_i32 = arith.constant 0 : i32
    %c0_i32_0 = arith.constant 0 : i32
    %c0_i32_1 = arith.constant 0 : i32
    return %c0_i32, %c0_i32_0 : i32, i32
  }
  func.func @transform_3(%arg0: i32) -> (i32, i32) {
    %c0_i32 = arith.constant 0 : i32
    %c0_i32_0 = arith.constant 0 : i32
    %c0_i32_1 = arith.constant 0 : i32
    return %c0_i32, %c0_i32_0 : i32, i32
  }
  func.func @transform_4(%arg0: i32) -> (i32, i32) {
    %c0_i32 = arith.constant 0 : i32
    %c0_i32_0 = arith.constant 0 : i32
    %c0_i32_1 = arith.constant 0 : i32
    return %c0_i32, %c0_i32_0 : i32, i32
  }
  func.func @transform_5(%arg0: i32) -> (i32, i32) {
    %c0_i32 = arith.constant 0 : i32
    %c0_i32_0 = arith.constant 0 : i32
    return %arg0, %c0_i32 : i32, i32
  }
  func.func @transform_6(%arg0: i32) -> (i32, i32) {
    %c0_i32 = arith.constant 0 : i32
    %c0_i32_0 = arith.constant 0 : i32
    return %arg0, %c0_i32 : i32, i32
  }
}

</mosaic_0001>

<llo_original>
// kernel: tpu_custom_call.1
$region0: #{tpu_custom_call.1}
  #allocation0 [shape = 'u32[]', space=smem, size = 0x4, offset = 0x4, fixed_abs, tag = 'smem constant byte address 0x4 - core index']
  #allocation1 [shape = 'u32[144,128]{1,0:T(1,128)}', space=vmem, size = 0x12000, scoped, tag = 'internal scratch']
  %s0 = inlined_call_operand.vmem [shape: f32[8,10], index: 0, kind: input, shape index: {}]
  %s1 = inlined_call_operand.vmem [shape: f32[10,20], index: 1, kind: input, shape index: {}]
  %s2 = inlined_call_operand.vmem [shape: f32[1,20], index: 2, kind: input, shape index: {}]
  %s3 = inlined_call_operand.vmem [shape: f32[20,5], index: 3, kind: input, shape index: {}]
  %s4 = inlined_call_operand.vmem [shape: f32[1,5], index: 4, kind: input, shape index: {}]
  %s5 = inlined_call_operand.vmem [shape: f32[8,20], index: 5, kind: input, shape index: {}]
  %s6 = inlined_call_operand.hbm [shape: f32[8,5], index: 6, kind: output, shape index: {}]
  %s7 = sld [smem:[#allocation0]]
  $region34: #{tpu_custom_call.1} parent=0
    _
  %s9 = ssub.s32 1, %s7
  %s10 = scalar_select 0, %s9, %s7
  $region1: #{tpu_custom_call.1} parent=0
    #allocation2 [shape = 'u8[4096]{0}', space=vmem, size = 0x1000, scoped, tag = 'output window, operand 0, single buffered']
    #allocation3 [shape = 's32[1]{0}', space=sflag, size = 0x4, scoped, tag = 'scoped memory for tpu_custom_call.1']
    %11 = vsyncpa [#allocation3], 0
    // Predicated region
    $region2: #{tpu_custom_call.1} parent=1 // pred_check
      _
    $region3: #{tpu_custom_call.1} parent=1 // pred_check_branch
      %13 = sbr.rel (0) target = $region5
    $region4: #{tpu_custom_call.1} parent=1 // pred_region
      _
    $region5: #{tpu_custom_call.1} parent=1 // pred_fallthru
      _
    // Predicated region
    $region6: #{tpu_custom_call.1} parent=1 // pred_check
      _
    $region7: #{tpu_custom_call.1} parent=1 // pred_check_branch
      %15 = sbr.rel (0) target = $region9
    $region8: #{tpu_custom_call.1} parent=1 // pred_region
      _
    $region9: #{tpu_custom_call.1} parent=1 // pred_fallthru
      _
    // Predicated region
    $region10: #{tpu_custom_call.1} parent=1 // pred_check
      _
    $region11: #{tpu_custom_call.1} parent=1 // pred_check_branch
      %17 = sbr.rel (0) target = $region13
    $region12: #{tpu_custom_call.1} parent=1 // pred_region
      _
    $region13: #{tpu_custom_call.1} parent=1 // pred_fallthru
      _
    // Predicated region
    $region14: #{tpu_custom_call.1} parent=1 // pred_check
      _
    $region15: #{tpu_custom_call.1} parent=1 // pred_check_branch
      %19 = sbr.rel (0) target = $region17
    $region16: #{tpu_custom_call.1} parent=1 // pred_region
      _
    $region17: #{tpu_custom_call.1} parent=1 // pred_fallthru
      _
    // Predicated region
    $region18: #{tpu_custom_call.1} parent=1 // pred_check
      _
    $region19: #{tpu_custom_call.1} parent=1 // pred_check_branch
      %21 = sbr.rel (0) target = $region21
    $region20: #{tpu_custom_call.1} parent=1 // pred_region
      _
    $region21: #{tpu_custom_call.1} parent=1 // pred_fallthru
      _
    // Predicated region
    $region22: #{tpu_custom_call.1} parent=1 // pred_check
      _
    $region23: #{tpu_custom_call.1} parent=1 // pred_check_branch
      %23 = sbr.rel (0) target = $region25
    $region24: #{tpu_custom_call.1} parent=1 // pred_region
      _
    $region25: #{tpu_custom_call.1} parent=1 // pred_fallthru
      _
    %v24 = vld [vmem:[%s0] sm:$0xff]
    %v25 = vld [vmem:[%s1] sm:$0xff]
    %v26 = vld [vmem:[%s1 + $0x8] sm:$0x3]
    %v27 = vld [vmem:[%s2] sm:$0x1]
    %v29 = vlaneseq
    %v30 = vshrl.u32 %v29, 7
    %v31 = vsub.s32 0, %v30
    %v32 = vrot.slane %v27, %v31
    %vm34 = vcmask 80896
    %v36 = vsel %vm34, %v24, 0
    %vm38 = vcmask 1041408
    %v40 = vsel %vm38, %v26, 0
    %42 = vmatprep.subr.mxu0 0.0
    %43 = vmatpush1.msra.mxu0 0.0
    %44 = vmatprep.subr.mxu0 0.0
    %45 = vmatpush1.msra.mxu0 0.0
    %46 = vmatprep.subr.mxu0 0.0
    %47 = vmatpush1.msra.mxu0 0.0
    %48 = vmatprep.subr.mxu0 0.0
    %49 = vmatpush1.msra.mxu0 0.0
    %50 = vmatprep.subr.mxu0 0.0
    %51 = vmatpush1.msra.mxu0 0.0
    %52 = vmatprep.subr.mxu0 0.0
    %53 = vmatpush1.msra.mxu0 0.0
    %54 = vmatprep.subr.mxu0 0.0
    %55 = vmatpush1.msra.mxu0 0.0
    %56 = vmatprep.subr.mxu0 0.0
    %57 = vmatpush1.msra.mxu0 0.0
    %58 = vmatprep.subr.mxu0 0.0
    %59 = vmatpush1.msra.mxu0 0.0
    %60 = vmatprep.subr.mxu0 0.0
    %61 = vmatpush1.msra.mxu0 0.0
    %62 = vmatprep.subr.mxu0 0.0
    %63 = vmatpush1.msra.mxu0 0.0
    %64 = vmatprep.subr.mxu0 0.0
    %65 = vmatpush1.msra.mxu0 0.0
    %66 = vmatprep.subr.mxu0 0.0
    %67 = vmatpush1.msra.mxu0 0.0
    %68 = vmatprep.subr.mxu0 0.0
    %69 = vmatpush1.msra.mxu0 0.0
    %70 = vmatprep.subr.mxu0 0.0
    %71 = vmatpush1.msra.mxu0 %v40
    %72 = vmatprep.subr.mxu0 0.0
    %73 = vmatpush1.msra.mxu0 %v25
    %74 = vmatprep.subr.mxu0 0.0
    %75 = vmatpush2.msra.mxu0 0.0
    %76 = vmatprep.subr.mxu0 0.0
    %77 = vmatpush2.msra.mxu0 0.0
    %78 = vmatprep.subr.mxu0 0.0
    %79 = vmatpush2.msra.mxu0 0.0
    %80 = vmatprep.subr.mxu0 0.0
    %81 = vmatpush2.msra.mxu0 0.0
    %82 = vmatprep.subr.mxu0 0.0
    %83 = vmatpush2.msra.mxu0 0.0
    %84 = vmatprep.subr.mxu0 0.0
    %85 = vmatpush2.msra.mxu0 0.0
    %86 = vmatprep.subr.mxu0 0.0
    %87 = vmatpush2.msra.mxu0 0.0
    %88 = vmatprep.subr.mxu0 0.0
    %89 = vmatpush2.msra.mxu0 0.0
    %90 = vmatprep.subr.mxu0 0.0
    %91 = vmatpush2.msra.mxu0 0.0
    %92 = vmatprep.subr.mxu0 0.0
    %93 = vmatpush2.msra.mxu0 0.0
    %94 = vmatprep.subr.mxu0 0.0
    %95 = vmatpush2.msra.mxu0 0.0
    %96 = vmatprep.subr.mxu0 0.0
    %97 = vmatpush2.msra.mxu0 0.0
    %98 = vmatprep.subr.mxu0 0.0
    %99 = vmatpush2.msra.mxu0 0.0
    %100 = vmatprep.subr.mxu0 0.0
    %101 = vmatpush2.msra.mxu0 0.0
    %102 = vmatprep.subr.mxu0 0.0
    %103 = vmatpush2.msra.mxu0 0.0
    %104 = vmatprep.subr.mxu0 0.0
    %105 = vmatpush2.msra.mxu0 0.0
    %106 = vmatprep.mubr.f32.mxu0 0.0
    %107 = vmatmul.mubr.f32.gmra.mxu0 %v36
    %v108 = vpop.f32.mrf.mxu0
    %v109 = vadd.f32 %v32, %v108
    %v110 = vpop.f32.mrf.mxu0
    %111 = vdwg.mxu0
    %v112 = vmax.f32 %v109, 0.0
    %v113 = vld [vmem:[%s5] sm:$0xff]
    %vm114 = vcmp.ge.f32.partialorder %v113, 0.1
    %v115 = vmul.f32 %v112, 1.1111112
    %v116 = vsel %vm114, %v115, 0.0
    %v117 = vld [vmem:[%s3] sm:$0xff]
    %v118 = vld [vmem:[%s3 + $0x8] sm:$0xff]
    %v119 = vld [vmem:[%s3 + $0x10] sm:$0xf]
    %v120 = vld [vmem:[%s4] sm:$0x1]
    %v122 = vlaneseq
    %v123 = vshrl.u32 %v122, 7
    %v124 = vsub.s32 0, %v123
    %v125 = vrot.slane %v120, %v124
    %vm127 = vcmask 162816
    %v129 = vsel %vm127, %v116, 0
    %vm131 = vcmask 1043456
    %v133 = vsel %vm131, %v119, 0
    %135 = vmatprep.subr.mxu0 0.0
    %136 = vmatpush1.msra.mxu0 0.0
    %137 = vmatprep.subr.mxu0 0.0
    %138 = vmatpush1.msra.mxu0 0.0
    %139 = vmatprep.subr.mxu0 0.0
    %140 = vmatpush1.msra.mxu0 0.0
    %141 = vmatprep.subr.mxu0 0.0
    %142 = vmatpush1.msra.mxu0 0.0
    %143 = vmatprep.subr.mxu0 0.0
    %144 = vmatpush1.msra.mxu0 0.0
    %145 = vmatprep.subr.mxu0 0.0
    %146 = vmatpush1.msra.mxu0 0.0
    %147 = vmatprep.subr.mxu0 0.0
    %148 = vmatpush1.msra.mxu0 0.0
    %149 = vmatprep.subr.mxu0 0.0
    %150 = vmatpush1.msra.mxu0 0.0
    %151 = vmatprep.subr.mxu0 0.0
    %152 = vmatpush1.msra.mxu0 0.0
    %153 = vmatprep.subr.mxu0 0.0
    %154 = vmatpush1.msra.mxu0 0.0
    %155 = vmatprep.subr.mxu0 0.0
    %156 = vmatpush1.msra.mxu0 0.0
    %157 = vmatprep.subr.mxu0 0.0
    %158 = vmatpush1.msra.mxu0 0.0
    %159 = vmatprep.subr.mxu0 0.0
    %160 = vmatpush1.msra.mxu0 0.0
    %161 = vmatprep.subr.mxu0 0.0
    %162 = vmatpush1.msra.mxu0 %v133
    %163 = vmatprep.subr.mxu0 0.0
    %164 = vmatpush1.msra.mxu0 %v118
    %165 = vmatprep.subr.mxu0 0.0
    %166 = vmatpush1.msra.mxu0 %v117
    %167 = vmatprep.subr.mxu0 0.0
    %168 = vmatpush2.msra.mxu0 0.0
    %169 = vmatprep.subr.mxu0 0.0
    %170 = vmatpush2.msra.mxu0 0.0
    %171 = vmatprep.subr.mxu0 0.0
    %172 = vmatpush2.msra.mxu0 0.0
    %173 = vmatprep.subr.mxu0 0.0
    %174 = vmatpush2.msra.mxu0 0.0
    %175 = vmatprep.subr.mxu0 0.0
    %176 = vmatpush2.msra.mxu0 0.0
    %177 = vmatprep.subr.mxu0 0.0
    %178 = vmatpush2.msra.mxu0 0.0
    %179 = vmatprep.subr.mxu0 0.0
    %180 = vmatpush2.msra.mxu0 0.0
    %181 = vmatprep.subr.mxu0 0.0
    %182 = vmatpush2.msra.mxu0 0.0
    %183 = vmatprep.subr.mxu0 0.0
    %184 = vmatpush2.msra.mxu0 0.0
    %185 = vmatprep.subr.mxu0 0.0
    %186 = vmatpush2.msra.mxu0 0.0
    %187 = vmatprep.subr.mxu0 0.0
    %188 = vmatpush2.msra.mxu0 0.0
    %189 = vmatprep.subr.mxu0 0.0
    %190 = vmatpush2.msra.mxu0 0.0
    %191 = vmatprep.subr.mxu0 0.0
    %192 = vmatpush2.msra.mxu0 0.0
    %193 = vmatprep.subr.mxu0 0.0
    %194 = vmatpush2.msra.mxu0 0.0
    %195 = vmatprep.subr.mxu0 0.0
    %196 = vmatpush2.msra.mxu0 0.0
    %197 = vmatprep.subr.mxu0 0.0
    %198 = vmatpush2.msra.mxu0 0.0
    %199 = vmatprep.mubr.f32.mxu0 0.0
    %200 = vmatmul.mubr.f32.gmra.mxu0 %v129
    %v201 = vpop.f32.mrf.mxu0
    %v202 = vadd.f32 %v125, %v201
    %v203 = vpop.f32.mrf.mxu0
    %204 = vdwg.mxu0
    %vm205 = vcmask 39936
    %206 = vst.msk [vmem:[#allocation2] sm:$0xff] %vm205, %v202
    // Predicated region
    $region26: #{tpu_custom_call.1} parent=1 // pred_check
      _
    $region27: #{tpu_custom_call.1} parent=1 // pred_check_branch
      %208 = sbr.rel (0) target = $region29
    $region28: #{tpu_custom_call.1} parent=1 // pred_region
      %s210 = ssub.s32 128, 128
      %211 = vsyncadd [#allocation3], %s210
      %s213 = sshll.u32 [#allocation2], 4
      %s214 = int_to_ptr.vmem [resolvable:$true] %s213
      %216 = dma.vmem_to_hbm [thread:$0]  %s214, 128, %s6, [#allocation3]
    $region29: #{tpu_custom_call.1} parent=1 // pred_fallthru
      _
    // Predicated region
    $region30: #{tpu_custom_call.1} parent=1 // pred_check
      _
    $region31: #{tpu_custom_call.1} parent=1 // pred_check_branch
      %218 = sbr.rel (0) target = $region33
    $region32: #{tpu_custom_call.1} parent=1 // pred_region
      %219 = dma.done [#allocation3], 128
    $region33: #{tpu_custom_call.1} parent=1 // pred_fallthru
      _
    %220 = vsyncpa [#allocation3], 1

</llo_original>
